<compile_context>
chip_gen: v6e
topology: v6e:2x2x1
jax: 0.10.0
libtpu: 0.0.40
codegen_flags: <defaults>
</compile_context>

<pallas_src>
import functools

import jax
import jax.numpy as jnp
import numpy as np
from jax import lax
from jax.experimental import pallas as pl
from jax.experimental.pallas import tpu as pltpu


# ---------------------------------------------------------------------------
# Positional encoding (mirrors PositionalEncoding.calculate_angle/pos_encoding)
# ---------------------------------------------------------------------------
def make_pos_encoding(seq_len, d_model, dtype=jnp.float32):
    pos = jnp.arange(seq_len, dtype=jnp.float32)[:, None]                     # [S, 1]
    div = jnp.exp(-(jnp.arange(0, d_model, 2, dtype=jnp.float32) / d_model)
                  * np.log(10000.0))                                          # [ceil(D/2)]
    angle = pos * div                                                         # [S, ceil(D/2)]
    sin, cos = jnp.sin(angle), jnp.cos(angle)
    pe = jnp.zeros((seq_len, d_model), dtype=jnp.float32)
    pe = pe.at[:, 0::2].set(sin[:, : (d_model + 1) // 2])
    pe = pe.at[:, 1::2].set(cos[:, : d_model // 2])                           # odd-D safe
    return pe.astype(dtype)


def _round_up(x, m):
    return ((x + m - 1) // m) * m


def _physical_vmem_bytes():
    """Generation-aware VMEM capacity (falls back to the v7x-safe 64 MiB)."""
    try:
        info = pltpu.get_tpu_info()
        for name in ("vmem_capacity_bytes", "vmem_size_bytes", "vmem_bytes"):
            v = getattr(info, name, None)
            if isinstance(v, int) and v > 0:
                return v
    except Exception:
        pass
    return 64 << 20


def _vmem_budgets():
    cap = _physical_vmem_bytes()
    if cap <= (64 << 20):            # v7x-class: 64 MiB per TensorCore
        return 36 << 20, 48 << 20    # (working-set budget, vmem_limit cap)
    return 64 << 20, 96 << 20        # v5e/v6e-class: 128 MiB physical


_ONEHOT_MAX_VOCAB = 2048


# ---------------------------------------------------------------------------
# Tile selection
# ---------------------------------------------------------------------------
def _pick_ts_onehot(B, S, V, D, itemsize, budget):
    """Sequence tile for the VMEM-resident-table / one-hot-matmul path."""
    table_bytes = V * D * itemsize
    per_tok = (B * (4                      # ids block (int32)
                    + 4 * V                # one-hot operand
                    + 4 * D                # f32 matmul result
                    + 2 * D * itemsize)    # double-buffered output block
               + 2 * D * 4)                # double-buffered pos block (f32)
    avail = budget - 2 * table_bytes       # table + headroom
    if avail <= 0:
        return None
    ts_cap = avail // per_tok
    if ts_cap >= S:
        return S                           # whole (unpadded) sequence, one block
    ts = int(ts_cap // 128) * 128          # lane-aligned ids / padded-seq blocks
    if ts < 128:
        return None
    return min(ts, 2048)


def _pick_ts_gather(S, D, itemsize, budget):
    """Sequence tile for the HBM-table / double-buffered DMA-gather path."""
    per_ts = D * (2 * itemsize             # double-buffered gather slot
                  + 2 * 4                  # double-buffered pos block (f32)
                  + 2 * itemsize           # double-buffered output block
                  + 4)                     # f32 add intermediate
    ts_cap = max(8, budget // per_ts)
    ts = int(min(1024, ts_cap))
    ts = max(8, (ts // 8) * 8)
    s8 = _round_up(S, 8)
    if s8 <= ts:
        return s8
    if ts >= 256:
        ts = max(256, (ts // 128) * 128)   # enforce a healthy tile floor
    return ts


# ---------------------------------------------------------------------------
# Path A: VMEM-resident table, one-hot MXU gather (small vocab)
# ---------------------------------------------------------------------------
def _onehot_kernel(ids_ref, table_ref, pos_ref, out_ref, *, B, TS, V, D):
    # ids_ref  : VMEM int32 [B, TS]   token ids for this sequence block
    # table_ref: VMEM [V, D]          whole table (constant block -> resident)
    # pos_ref  : VMEM f32 [TS, D]     positional-encoding slab for this block
    # out_ref  : VMEM [B, TS, D]
    ids = ids_ref[...]
    iota_v = lax.broadcasted_iota(jnp.int32, (B, TS, V), 2)
    onehot = (ids[:, :, None] == iota_v).astype(table_ref.dtype)
    emb = jnp.dot(onehot.reshape(B * TS, V), table_ref[...],
                  preferred_element_type=jnp.float32).reshape(B, TS, D)
    out_ref[...] = (emb + pos_ref[...][None, :, :]).astype(out_ref.dtype)


def _embedding_onehot(ids_pad, table, pos_pad, TS, vmem_limit):
    B, S_pad = ids_pad.shape
    V, D = table.shape
    NS = S_pad // TS
    kernel = functools.partial(_onehot_kernel, B=B, TS=TS, V=V, D=D)
    return pl.pallas_call(
        kernel,
        out_shape=jax.ShapeDtypeStruct((B, S_pad, D), table.dtype),
        grid=(NS,),
        in_specs=[
            pl.BlockSpec((B, TS), lambda s: (0, s)),      # ids block
            pl.BlockSpec((V, D), lambda s: (0, 0)),       # table resident in VMEM
            pl.BlockSpec((TS, D), lambda s: (s, 0)),      # pos slab
        ],
        out_specs=pl.BlockSpec((B, TS, D), lambda s: (0, s, 0)),
        compiler_params=pltpu.CompilerParams(
            dimension_semantics=("parallel",),
            vmem_limit_bytes=vmem_limit,
        ),
    )(ids_pad, table, pos_pad)


# ---------------------------------------------------------------------------
# Path B: HBM table, per-row DMA gather, double-buffered across grid steps
# ---------------------------------------------------------------------------
def _gather_kernel(ids_ref, table_hbm, pos_ref, out_ref, gather_buf, sem, *,
                   TS, S_pad):
    # ids_ref   : SMEM int32 [B * S_pad] (scalar prefetch, pre-clamped)
    # table_hbm : HBM ref [V, D]         (memory_space=pl.ANY)
    # pos_ref   : VMEM f32 [TS, D]
    # out_ref   : VMEM [1, TS, D]
    # gather_buf: VMEM [2, TS, D]        double-buffered gathered rows
    # sem       : DMA semaphores [2]     one per slot
    s = pl.program_id(0)
    b = pl.program_id(1)
    nb = pl.num_programs(1)
    slot = b % 2

    def issue(batch_idx, dst_slot):
        base = pl.multiple_of(batch_idx * S_pad + s * TS, 8)

        def body(r, carry):
            tok = ids_ref[base + r]
            pltpu.make_async_copy(
                table_hbm.at[tok], gather_buf.at[dst_slot, r], sem.at[dst_slot]
            ).start()
            return carry

        lax.fori_loop(0, TS, body, 0, unroll=min(TS, 8))

    # Prime the pipeline for this sequence block (first inner step only).
    @pl.when(b == 0)
    def _():
        issue(0, 0)

    # Cross-step prefetch: gather the NEXT batch element's rows into the other
    # slot before consuming the current one (hides the row-DMA latency).
    @pl.when(b + 1 < nb)
    def _():
        issue(b + 1, 1 - slot)

    # Single wait draining all TS row copies issued into `slot`: the (never
    # started) descriptor's size equals the summed row-copy bytes and targets
    # the same semaphore, so one wait covers the whole slot.
    pltpu.make_async_copy(
        gather_buf.at[1 - slot], gather_buf.at[slot], sem.at[slot]
    ).wait()

    out_ref[0] = (gather_buf[slot].astype(jnp.float32)
                  + pos_ref[...]).astype(out_ref.dtype)


def _embedding_gather(ids_pad, table, pos_pad, TS, vmem_limit):
    B, S_pad = ids_pad.shape
    V, D = table.shape
    NS = S_pad // TS
    flat_ids = ids_pad.reshape(-1)

    kernel = functools.partial(_gather_kernel, TS=TS, S_pad=S_pad)
    grid_spec = pltpu.PrefetchScalarGridSpec(
        num_scalar_prefetch=1,                    # flat ids -> SMEM
        grid=(NS, B),                             # s outer (parallel), b inner (prefetch axis)
        in_specs=[
            pl.BlockSpec(memory_space=pl.ANY),                      # table stays in HBM
            pl.BlockSpec((TS, D), lambda s, b, ids: (s, 0)),        # pos slab, reused across b
        ],
        out_specs=pl.BlockSpec((1, TS, D), lambda s, b, ids: (b, s, 0)),
        scratch_shapes=[
            pltpu.VMEM((2, TS, D), table.dtype),  # double-buffered gather slots
            pltpu.SemaphoreType.DMA((2,)),        # one DMA sem per slot
        ],
    )
    return pl.pallas_call(
        kernel,
        out_shape=jax.ShapeDtypeStruct((B, S_pad, D), table.dtype),
        grid_spec=grid_spec,
        compiler_params=pltpu.CompilerParams(
            dimension_semantics=("parallel", "arbitrary"),
            vmem_limit_bytes=vmem_limit,
        ),
    )(flat_ids, table, pos_pad)


# ---------------------------------------------------------------------------
# Public entry point
# ---------------------------------------------------------------------------
def embedding_forward(ids, table):
    """ids: [B, S] int token ids, table: [vocab, d_model] -> [B, S, d_model].

    Out-of-range ids are clamped to [0, vocab) (torch.nn.Embedding would raise).
    """
    B, S = ids.shape
    V, D = table.shape
    dtype = table.dtype
    itemsize = jnp.dtype(dtype).itemsize
    ws_budget, limit_cap = _vmem_budgets()

    ids = jnp.clip(ids.astype(jnp.int32), 0, V - 1)

    ts_a = (_pick_ts_onehot(B, S, V, D, itemsize, ws_budget)
            if V <= _ONEHOT_MAX_VOCAB else None)

    if ts_a is not None:
        TS = ts_a
        S_pad = S if TS == S else _round_up(S, TS)
        need = (V * D * itemsize
                + 2 * (B * TS * 4 + TS * D * 4 + B * TS * D * itemsize)
                + B * TS * V * 4 + B * TS * D * 4)
        run = _embedding_onehot
    else:
        TS = _pick_ts_gather(S, D, itemsize, ws_budget)
        S_pad = _round_up(S, TS)
        need = TS * D * (4 * itemsize + 3 * 4)
        run = _embedding_gather

    vmem_limit = int(min(limit_cap, max(2 * need, 16 << 20)))

    if S_pad != S:
        ids = jnp.pad(ids, ((0, 0), (0, S_pad - S)))   # pad with id 0 (valid row)
    pos = make_pos_encoding(S_pad, D, jnp.float32)

    out = run(ids, table, pos, TS, vmem_limit)
    return out[:, :S, :] if S_pad != S else out


if __name__ == "__main__":
    B, S = 2, 8
    VOCAB, D_MODEL = 64, 32

    key = jax.random.PRNGKey(0)
    k_ids, k_tbl = jax.random.split(key)

    # nn.Embedding default init: weights ~ N(0, 1)
    table = jax.random.normal(k_tbl, (VOCAB, D_MODEL), dtype=jnp.float32)
    ids = jax.random.randint(k_ids, (B, S), 0, VOCAB, dtype=jnp.int32)

    out = embedding_forward(ids, table)
    out = jax.block_until_ready(out)

    # Plain-JAX reference for the module's forward semantics.
    ref = jnp.take(table, ids, axis=0) + make_pos_encoding(S, D_MODEL)[None, :, :]
    np.testing.assert_allclose(np.asarray(out), np.asarray(ref), rtol=1e-5, atol=1e-5)
    assert out.shape == (B, S, D_MODEL) and out.dtype == jnp.float32

    print("KERNEL_OK")
</pallas_src>

<mosaic_0001>
module attributes {stable_mosaic.version = 11 : i64} {
  func.func @_onehot_kernel(%arg0: i32, %arg1: memref<2x8xi32, #tpu.memory_space<vmem>>, %arg2: memref<64x32xf32, #tpu.memory_space<vmem>>, %arg3: memref<8x32xf32, #tpu.memory_space<vmem>>, %arg4: memref<2x8x32xf32, #tpu.memory_space<vmem>>) attributes {dimension_semantics = [#tpu.dimension_semantics<parallel>], iteration_bounds = array<i64: 1>, scalar_prefetch = 0 : i64, scratch_operands = 0 : i64, tpu.core_type = #tpu.core_type<tc>, window_params = [{transform_indices = @transform_0, window_bounds = array<i64: 2, 8>}, {pipeline_mode = #tpu.pipeline_mode<synchronous>, transform_indices = @transform_1, window_bounds = array<i64: 64, 32>}, {transform_indices = @transform_2, window_bounds = array<i64: 8, 32>}, {transform_indices = @transform_3, window_bounds = array<i64: 2, 8, 32>}]} {
    %c0 = arith.constant 0 : index
    %c0_0 = arith.constant 0 : index
    %0 = vector.load %arg1[%c0, %c0_0] : memref<2x8xi32, #tpu.memory_space<vmem>>, vector<2x8xi32>
    %1 = tpu.iota {dimensions = array<i32: 2>} : vector<2x8x64xi32>
    %2 = vector.shape_cast %0 : vector<2x8xi32> to vector<2x8x1xi32>
    %3 = vector.broadcast %2 : vector<2x8x1xi32> to vector<2x8x64xi32>
    %4 = arith.cmpi eq, %3, %1 : vector<2x8x64xi32>
    %5 = arith.extui %4 : vector<2x8x64xi1> to vector<2x8x64xi32>
    %6 = arith.sitofp %5 : vector<2x8x64xi32> to vector<2x8x64xf32>
    %7 = vector.shape_cast %6 : vector<2x8x64xf32> to vector<16x64xf32>
    %c0_1 = arith.constant 0 : index
    %c0_2 = arith.constant 0 : index
    %8 = vector.load %arg2[%c0_1, %c0_2] : memref<64x32xf32, #tpu.memory_space<vmem>>, vector<64x32xf32>
    %cst = arith.constant dense<0.000000e+00> : vector<16x32xf32>
    %9 = tpu.matmul %7, %8, %cst {dimension_numbers = #tpu.dot_dimension_numbers<[1], [0], [0], [1], [0, 0, 1, 1], [], []>} : vector<16x64xf32>, vector<64x32xf32>, vector<16x32xf32> -> vector<16x32xf32>
    %10 = vector.shape_cast %9 : vector<16x32xf32> to vector<2x8x32xf32>
    %c0_3 = arith.constant 0 : index
    %c0_4 = arith.constant 0 : index
    %11 = vector.load %arg3[%c0_3, %c0_4] : memref<8x32xf32, #tpu.memory_space<vmem>>, vector<8x32xf32>
    %12 = vector.shape_cast %11 : vector<8x32xf32> to vector<1x8x32xf32>
    %13 = vector.broadcast %12 : vector<1x8x32xf32> to vector<2x8x32xf32>
    %14 = arith.addf %10, %13 : vector<2x8x32xf32>
    %c0_5 = arith.constant 0 : index
    %c0_6 = arith.constant 0 : index
    %c0_7 = arith.constant 0 : index
    %15 = vector.load %arg4[%c0_5, %c0_6, %c0_7] : memref<2x8x32xf32, #tpu.memory_space<vmem>>, vector<2x8x32xf32>
    tpu.vector_store %arg4[%c0_5, %c0_6, %c0_7], %14 {strides = array<i32>} : memref<2x8x32xf32, #tpu.memory_space<vmem>>, vector<2x8x32xf32>,
    return
  }
  func.func @transform_0(%arg0: i32) -> (i32, i32) {
    %c0_i32 = arith.constant 0 : i32
    %c0_i32_0 = arith.constant 0 : i32
    return %c0_i32, %arg0 : i32, i32
  }
  func.func @transform_1(%arg0: i32) -> (i32, i32) {
    %c0_i32 = arith.constant 0 : i32
    %c0_i32_0 = arith.constant 0 : i32
    %c0_i32_1 = arith.constant 0 : i32
    return %c0_i32, %c0_i32_0 : i32, i32
  }
  func.func @transform_2(%arg0: i32) -> (i32, i32) {
    %c0_i32 = arith.constant 0 : i32
    %c0_i32_0 = arith.constant 0 : i32
    return %arg0, %c0_i32 : i32, i32
  }
  func.func @transform_3(%arg0: i32) -> (i32, i32, i32) {
    %c0_i32 = arith.constant 0 : i32
    %c0_i32_0 = arith.constant 0 : i32
    %c0_i32_1 = arith.constant 0 : i32
    return %c0_i32, %arg0, %c0_i32_0 : i32, i32, i32
  }
}

</mosaic_0001>

<llo_original>
// kernel: tpu_custom_call.1
$region0: #{tpu_custom_call.1}
  #allocation0 [shape = 'u32[]', space=smem, size = 0x4, offset = 0x4, fixed_abs, tag = 'smem constant byte address 0x4 - core index']
  #allocation1 [shape = 'u32[144,128]{1,0:T(1,128)}', space=vmem, size = 0x12000, scoped, tag = 'internal scratch']
  %s0 = inlined_call_operand.vmem [shape: s32[2,8], index: 0, kind: input, shape index: {}]
  %s1 = inlined_call_operand.vmem [shape: f32[64,32], index: 1, kind: input, shape index: {}]
  %s2 = inlined_call_operand.vmem [shape: f32[8,32], index: 2, kind: input, shape index: {}]
  %s3 = inlined_call_operand.hbm [shape: f32[2,8,32], index: 3, kind: output, shape index: {}]
  %s4 = sld [smem:[#allocation0]]
  $region22: #{tpu_custom_call.1} parent=0
    _
  %s6 = ssub.s32 1, %s4
  %s7 = scalar_select 0, %s6, %s4
  $region1: #{tpu_custom_call.1} parent=0
    #allocation2 [shape = 'u8[8192]{0}', space=vmem, size = 0x2000, scoped, tag = 'output window, operand 0, single buffered']
    #allocation3 [shape = 's32[1]{0}', space=sflag, size = 0x4, scoped, tag = 'scoped memory for tpu_custom_call.1']
    %8 = vsyncpa [#allocation3], 0
    // Predicated region
    $region2: #{tpu_custom_call.1} parent=1 // pred_check
      _
    $region3: #{tpu_custom_call.1} parent=1 // pred_check_branch
      %10 = sbr.rel (0) target = $region5
    $region4: #{tpu_custom_call.1} parent=1 // pred_region
      _
    $region5: #{tpu_custom_call.1} parent=1 // pred_fallthru
      _
    // Predicated region
    $region6: #{tpu_custom_call.1} parent=1 // pred_check
      _
    $region7: #{tpu_custom_call.1} parent=1 // pred_check_branch
      %12 = sbr.rel (0) target = $region9
    $region8: #{tpu_custom_call.1} parent=1 // pred_region
      _
    $region9: #{tpu_custom_call.1} parent=1 // pred_fallthru
      _
    // Predicated region
    $region10: #{tpu_custom_call.1} parent=1 // pred_check
      _
    $region11: #{tpu_custom_call.1} parent=1 // pred_check_branch
      %14 = sbr.rel (0) target = $region13
    $region12: #{tpu_custom_call.1} parent=1 // pred_region
      _
    $region13: #{tpu_custom_call.1} parent=1 // pred_fallthru
      _
    %v15 = vld [vmem:[%s0] sm:$0x3]
    %v16 = vlaneseq
    %v17 = vand.u32 %v16, 127
    %v18 = vlaneseq
    %v19 = vshrl.u32 %v18, 7
    %v20 = vsub.s32 0, %v19
    %v21 = vrot.slane %v15, %v20
    %23 = vbcast.lane.b32.xlu0 %v21, 256
    %v24 = vpop.permute.xlu0 %23
    %v25 = vlaneseq
    %v26 = vshrl.u32 %v25, 7
    %v27 = vsub.s32 1, %v26
    %v28 = vrot.slane %v15, %v27
    %30 = vbcast.lane.b32.xlu0 %v28, 256
    %v31 = vpop.permute.xlu0 %30
    %vm32 = vcmp.eq.s32.totalorder %v24, %v17
    %vm33 = vcmp.eq.s32.totalorder %v31, %v17
    %v34 = vsel %vm32, 1, 0
    %v35 = vsel %vm33, 1, 0
    %v36 = vcvt.s32.f32 %v34
    %v37 = vcvt.s32.f32 %v35
    %v38 = vld [vmem:[%s1] sm:$0xff]
    %v39 = vld [vmem:[%s1 + $0x8] sm:$0xff]
    %v40 = vld [vmem:[%s1 + $0x10] sm:$0xff]
    %v41 = vld [vmem:[%s1 + $0x18] sm:$0xff]
    %v42 = vld [vmem:[%s1 + $0x20] sm:$0xff]
    %v43 = vld [vmem:[%s1 + $0x28] sm:$0xff]
    %v44 = vld [vmem:[%s1 + $0x30] sm:$0xff]
    %v45 = vld [vmem:[%s1 + $0x38] sm:$0xff]
    %vm46 = vcmask 523264
    %v48 = vsel %vm46, %v36, 0
    %v51 = vsel %vm46, %v37, 0
    %53 = vmatprep.subr.mxu0 0.0
    %54 = vmatpush1.msra.mxu0 0.0
    %55 = vmatprep.subr.mxu0 0.0
    %56 = vmatpush1.msra.mxu0 0.0
    %57 = vmatprep.subr.mxu0 0.0
    %58 = vmatpush1.msra.mxu0 0.0
    %59 = vmatprep.subr.mxu0 0.0
    %60 = vmatpush1.msra.mxu0 0.0
    %61 = vmatprep.subr.mxu0 0.0
    %62 = vmatpush1.msra.mxu0 0.0
    %63 = vmatprep.subr.mxu0 0.0
    %64 = vmatpush1.msra.mxu0 0.0
    %65 = vmatprep.subr.mxu0 0.0
    %66 = vmatpush1.msra.mxu0 0.0
    %67 = vmatprep.subr.mxu0 0.0
    %68 = vmatpush1.msra.mxu0 0.0
    %69 = vmatprep.subr.mxu0 0.0
    %70 = vmatpush1.msra.mxu0 %v45
    %71 = vmatprep.subr.mxu0 0.0
    %72 = vmatpush1.msra.mxu0 %v44
    %73 = vmatprep.subr.mxu0 0.0
    %74 = vmatpush1.msra.mxu0 %v43
    %75 = vmatprep.subr.mxu0 0.0
    %76 = vmatpush1.msra.mxu0 %v42
    %77 = vmatprep.subr.mxu0 0.0
    %78 = vmatpush1.msra.mxu0 %v41
    %79 = vmatprep.subr.mxu0 0.0
    %80 = vmatpush1.msra.mxu0 %v40
    %81 = vmatprep.subr.mxu0 0.0
    %82 = vmatpush1.msra.mxu0 %v39
    %83 = vmatprep.subr.mxu0 0.0
    %84 = vmatpush1.msra.mxu0 %v38
    %85 = vmatprep.subr.mxu0 0.0
    %86 = vmatpush2.msra.mxu0 0.0
    %87 = vmatprep.subr.mxu0 0.0
    %88 = vmatpush2.msra.mxu0 0.0
    %89 = vmatprep.subr.mxu0 0.0
    %90 = vmatpush2.msra.mxu0 0.0
    %91 = vmatprep.subr.mxu0 0.0
    %92 = vmatpush2.msra.mxu0 0.0
    %93 = vmatprep.subr.mxu0 0.0
    %94 = vmatpush2.msra.mxu0 0.0
    %95 = vmatprep.subr.mxu0 0.0
    %96 = vmatpush2.msra.mxu0 0.0
    %97 = vmatprep.subr.mxu0 0.0
    %98 = vmatpush2.msra.mxu0 0.0
    %99 = vmatprep.subr.mxu0 0.0
    %100 = vmatpush2.msra.mxu0 0.0
    %101 = vmatprep.subr.mxu0 0.0
    %102 = vmatpush2.msra.mxu0 0.0
    %103 = vmatprep.subr.mxu0 0.0
    %104 = vmatpush2.msra.mxu0 0.0
    %105 = vmatprep.subr.mxu0 0.0
    %106 = vmatpush2.msra.mxu0 0.0
    %107 = vmatprep.subr.mxu0 0.0
    %108 = vmatpush2.msra.mxu0 0.0
    %109 = vmatprep.subr.mxu0 0.0
    %110 = vmatpush2.msra.mxu0 0.0
    %111 = vmatprep.subr.mxu0 0.0
    %112 = vmatpush2.msra.mxu0 0.0
    %113 = vmatprep.subr.mxu0 0.0
    %114 = vmatpush2.msra.mxu0 0.0
    %115 = vmatprep.subr.mxu0 0.0
    %116 = vmatpush2.msra.mxu0 0.0
    %117 = vmatprep.mubr.f32.mxu0 0.0
    %118 = vmatmul.mubr.f32.gmra.mxu0 %v48
    %v119 = vpop.f32.mrf.mxu0
    %v120 = vadd.f32 0.0, %v119
    %v121 = vpop.f32.mrf.mxu0
    %122 = vmatprep.mubr.f32.mxu0 0.0
    %123 = vmatmul.mubr.f32.gmra.mxu0 %v51
    %v124 = vpop.f32.mrf.mxu0
    %v125 = vadd.f32 0.0, %v124
    %v126 = vpop.f32.mrf.mxu0
    %127 = vdwg.mxu0
    %v128 = vld [vmem:[%s2] sm:$0xff]
    %v129 = vadd.f32 %v120, %v128
    %v130 = vadd.f32 %v125, %v128
    %vm131 = vcmask 261120
    %132 = vst.msk [vmem:[#allocation2] sm:$0xff] %vm131, %v129
    %133 = vst.msk [vmem:[#allocation2 + $0x8] sm:$0xff] %vm131, %v130
    // Predicated region
    $region14: #{tpu_custom_call.1} parent=1 // pred_check
      _
    $region15: #{tpu_custom_call.1} parent=1 // pred_check_branch
      %135 = sbr.rel (0) target = $region17
    $region16: #{tpu_custom_call.1} parent=1 // pred_region
      %s137 = ssub.s32 256, 256
      %138 = vsyncadd [#allocation3], %s137
      %s139 = sshll.u32 [#allocation2], 4
      %s140 = int_to_ptr.vmem [resolvable:$true] %s139
      %145 = dma.vmem_to_hbm [thread:$0]  %s140, 256, %s3, [#allocation3], 128, 128, 8
    $region17: #{tpu_custom_call.1} parent=1 // pred_fallthru
      _
    // Predicated region
    $region18: #{tpu_custom_call.1} parent=1 // pred_check
      _
    $region19: #{tpu_custom_call.1} parent=1 // pred_check_branch
      %147 = sbr.rel (0) target = $region21
    $region20: #{tpu_custom_call.1} parent=1 // pred_region
      %148 = dma.done [#allocation3], 256
    $region21: #{tpu_custom_call.1} parent=1 // pred_fallthru
      _
    %149 = vsyncpa [#allocation3], 1

</llo_original>
